<compile_context>
chip_gen: v7x
topology: tpu7x:2x2x1
jax: 0.10.0
libtpu: 0.0.40
codegen_flags: <defaults>
</compile_context>

<pallas_src>
import jax
import jax.numpy as jnp
from jax.experimental import pallas as pl
from jax.experimental.pallas import tpu as pltpu

_LANE_CANDIDATES = (1024, 512, 256, 128)  # preferred lane widths (multiples of 128)
_PAD_K = 1024                             # lane width for the ragged fallback path
_SMALL_N = 1024                           # below one lane row: plain XLA is cheaper


def _abs_tanh_kernel(x_ref, o_ref):
    # Pure elementwise: tanh -> EUP slot, abs -> single VPU op. Memory-bound.
    o_ref[...] = jnp.abs(jnp.tanh(x_ref[...]))


def _chip_config():
    """Per-TPU-generation tiling budget (row cap, VMEM budget, scoped limit, #TCs)."""
    kind = ""
    try:
        kind = jax.devices()[0].device_kind.lower()
    except Exception:
        pass
    if "v7" in kind or "7x" in kind:
        # v7x: 64 MiB VMEM per TC, 32 MiB scoped default -> raise it; 2 TensorCores.
        return dict(row_cap=2048, vmem_budget=40 << 20, vmem_limit=48 << 20,
                    multi_core=True)
    if "v6" in kind:
        # v6e: 128 MiB VMEM, 32 MiB scoped default -> 1024-row tiles fit comfortably.
        return dict(row_cap=1024, vmem_budget=24 << 20, vmem_limit=None,
                    multi_core=False)
    # v5e (16 MiB scoped default) and unknown chips: conservative 512-row tiles.
    return dict(row_cap=512, vmem_budget=12 << 20, vmem_limit=None,
                multi_core=False)


def abs_tanh(x: jax.Array) -> jax.Array:
    """Elementwise |tanh(x)| for arbitrary-rank input (matches torch.abs(torch.tanh(x)))."""
    orig_shape = x.shape
    dtype = x.dtype
    n = x.size
    if n == 0:
        return x
    if n < _SMALL_N:
        # Tiny inputs: kernel launch + reshape plumbing dominates; fused XLA wins.
        return jnp.abs(jnp.tanh(x))

    itemsize = jnp.dtype(dtype).itemsize
    flat = x.reshape(-1)

    # Lane-dense 2D view with zero pad/slice copies whenever possible.
    K = next((k for k in _LANE_CANDIDATES if n % k == 0), None)
    padded = K is None
    if padded:
        # Truly ragged size: pad to a multiple of 1024 and slice the result.
        # Pad values are irrelevant (tanh of anything is finite; padded lanes
        # are removed by the final slice).
        K = _PAD_K
        n_pad = ((n + K - 1) // K) * K
        flat = jnp.pad(flat, (0, n_pad - n))
        rows = n_pad // K
    else:
        rows = n // K

    cfg = _chip_config()
    # Input + output, each double-buffered -> 4 live blocks of rt*K*itemsize bytes.
    rt = cfg["vmem_budget"] // (4 * K * itemsize)
    rt = max(8, min(cfg["row_cap"], (rt // 8) * 8))

    if rows <= rt:
        if cfg["multi_core"] and rows >= 16:
            # Give both v7x TensorCores work: force at least 2 "parallel" grid steps.
            rt = (((rows + 1) // 2) + 7) // 8 * 8
        else:
            rt = rows  # single full-array block (block dims == array dims)
    grid = (pl.cdiv(rows, rt),)  # ragged last block: OOB reads padded, stores masked

    x2 = flat.reshape(rows, K)

    out2 = pl.pallas_call(
        _abs_tanh_kernel,
        out_shape=jax.ShapeDtypeStruct((rows, K), dtype),
        grid_spec=pltpu.PrefetchScalarGridSpec(
            num_scalar_prefetch=0,
            grid=grid,
            in_specs=[pl.BlockSpec((rt, K), lambda i: (i, 0))],
            out_specs=pl.BlockSpec((rt, K), lambda i: (i, 0)),
        ),
        compiler_params=pltpu.CompilerParams(
            dimension_semantics=("parallel",),
            vmem_limit_bytes=cfg["vmem_limit"],
        ),
        cost_estimate=pl.CostEstimate(
            flops=n, transcendentals=n, bytes_accessed=2 * n * itemsize),
    )(x2)

    out = out2.reshape(-1)
    if padded:
        out = out[:n]
    return out.reshape(orig_shape)


if __name__ == "__main__":
    key = jax.random.PRNGKey(0)

    # Primary small NCHW input (2048 elems -> K=1024, rows=2, no pad/slice).
    x = jax.random.normal(key, (2, 4, 16, 16), dtype=jnp.float32)
    y = abs_tanh(x)
    jax.block_until_ready(y)
    y_ref = jnp.abs(jnp.tanh(x))
    assert y.shape == x.shape and y.dtype == x.dtype
    assert jnp.allclose(y, y_ref, atol=1e-6, rtol=1e-6)

    # Divisible by 512 but not 1024 -> exercises adaptive lane width (K=512).
    x_512 = jax.random.normal(jax.random.PRNGKey(1), (2, 3, 32, 40), dtype=jnp.float32)
    y_512 = abs_tanh(x_512)
    jax.block_until_ready(y_512)
    assert jnp.allclose(y_512, jnp.abs(jnp.tanh(x_512)), atol=1e-6, rtol=1e-6)

    # Ragged size (not a multiple of 128) -> exercises the pad + slice fallback.
    x_rag = jax.random.normal(jax.random.PRNGKey(2), (3, 5, 123, 37), dtype=jnp.float32)
    y_rag = abs_tanh(x_rag)
    jax.block_until_ready(y_rag)
    assert jnp.allclose(y_rag, jnp.abs(jnp.tanh(x_rag)), atol=1e-6, rtol=1e-6)

    # Medium size (576 lane rows) -> exercises multi-step cdiv grid on v5e / v7x split.
    x_med = jax.random.normal(jax.random.PRNGKey(3), (1, 8, 256, 288), dtype=jnp.float32)
    y_med = abs_tanh(x_med)
    jax.block_until_ready(y_med)
    assert jnp.allclose(y_med, jnp.abs(jnp.tanh(x_med)), atol=1e-6, rtol=1e-6)

    print("KERNEL_OK")
</pallas_src>

<mosaic_0001>
module attributes {stable_mosaic.version = 11 : i64} {
  func.func @_abs_tanh_kernel(%arg0: i32, %arg1: memref<2x1024xf32, #tpu.memory_space<vmem>>, %arg2: memref<2x1024xf32, #tpu.memory_space<vmem>>) attributes {dimension_semantics = [#tpu.dimension_semantics<parallel>], iteration_bounds = array<i64: 1>, scalar_prefetch = 0 : i64, scratch_operands = 0 : i64, tpu.core_type = #tpu.core_type<tc>, window_params = [{transform_indices = @transform_0, window_bounds = array<i64: 2, 1024>}, {transform_indices = @transform_1, window_bounds = array<i64: 2, 1024>}]} {
    %c0 = arith.constant 0 : index
    %c0_0 = arith.constant 0 : index
    %0 = vector.load %arg1[%c0, %c0_0] : memref<2x1024xf32, #tpu.memory_space<vmem>>, vector<2x1024xf32>
    %1 = math.tanh %0 : vector<2x1024xf32>
    %2 = math.absf %1 : vector<2x1024xf32>
    %c0_1 = arith.constant 0 : index
    %c0_2 = arith.constant 0 : index
    %3 = vector.load %arg2[%c0_1, %c0_2] : memref<2x1024xf32, #tpu.memory_space<vmem>>, vector<2x1024xf32>
    tpu.vector_store %arg2[%c0_1, %c0_2], %2 {strides = array<i32>} : memref<2x1024xf32, #tpu.memory_space<vmem>>, vector<2x1024xf32>,
    return
  }
  func.func @transform_0(%arg0: i32) -> (i32, i32) {
    %c0_i32 = arith.constant 0 : i32
    %c0_i32_0 = arith.constant 0 : i32
    return %arg0, %c0_i32 : i32, i32
  }
  func.func @transform_1(%arg0: i32) -> (i32, i32) {
    %c0_i32 = arith.constant 0 : i32
    %c0_i32_0 = arith.constant 0 : i32
    return %arg0, %c0_i32 : i32, i32
  }
}

</mosaic_0001>

<llo_original>
// kernel: tpu_custom_call.1
$region0: #{tpu_custom_call.1}
  #allocation0 [shape = 'u32[]', space=smem, size = 0x4, offset = 0x4, fixed_abs, tag = 'smem constant byte address 0x4 - core index']
  #allocation1 [shape = 'u32[144,128]{1,0:T(1,128)}', space=vmem, size = 0x12000, scoped, tag = 'internal scratch']
  %s0 = inlined_call_operand.hbm [shape: f32[2,1024], index: 0, kind: input, shape index: {}]
  %s1 = inlined_call_operand.hbm [shape: f32[2,1024], index: 1, kind: output, shape index: {}]
  %s2 = sld [smem:[#allocation0]]
  $region18: #{tpu_custom_call.1} parent=0
    _
  %s4 = ssub.s32 1, %s2
  %s5 = scalar_select 0, %s4, %s2
  $region1: #{tpu_custom_call.1} parent=0
    #allocation2 [shape = 'u8[8192]{0}', space=vmem, size = 0x2000, scoped, tag = 'input window, operand 0, single buffered']
    #allocation3 [shape = 's32[1]{0}', space=sflag, size = 0x4, scoped, tag = 'scoped memory for tpu_custom_call.1']
    #allocation4 [shape = 's32[1]{0}', space=sflag, size = 0x4, scoped, tag = 'scoped memory for tpu_custom_call.1']
    #allocation5 [shape = 'u8[8192]{0}', space=vmem, size = 0x2000, scoped, tag = 'output window, operand 0, single buffered']
    %6 = vsyncpa [#allocation3], 0
    %7 = vsyncpa [#allocation4], 0
    // Predicated region
    $region2: #{tpu_custom_call.1} parent=1 // pred_check
      _
    $region3: #{tpu_custom_call.1} parent=1 // pred_check_branch
      %9 = sbr.rel (0) target = $region5
    $region4: #{tpu_custom_call.1} parent=1 // pred_region
      %s11 = ssub.s32 256, 256
      %12 = vsyncadd [#allocation3], %s11
      %s14 = sshll.u32 [#allocation2], 4
      %s15 = int_to_ptr.vmem [resolvable:$true] %s14
      %17 = dma.hbm_to_vmem [thread:$0]  %s0, 256, %s15, [#allocation3]
    $region5: #{tpu_custom_call.1} parent=1 // pred_fallthru
      _
    // Predicated region
    $region6: #{tpu_custom_call.1} parent=1 // pred_check
      _
    $region7: #{tpu_custom_call.1} parent=1 // pred_check_branch
      %19 = sbr.rel (0) target = $region9
    $region8: #{tpu_custom_call.1} parent=1 // pred_region
      %20 = dma.done [#allocation3], 256
    $region9: #{tpu_custom_call.1} parent=1 // pred_fallthru
      _
    %v21 = vld [vmem:[#allocation2] sm:$0xff]
    %v22 = vld [vmem:[#allocation2 + $0x8] sm:$0xff]
    %v23 = vtanh.pop %v21
    %v24 = vtanh.pop %v22
    %v25 = vand.u32 2147483647, %v23
    %v26 = vand.u32 2147483647, %v24
    %27 = vst [vmem:[#allocation5] sm:$0xff] %v25
    %28 = vst [vmem:[#allocation5 + $0x8] sm:$0xff] %v26
    // Predicated region
    $region10: #{tpu_custom_call.1} parent=1 // pred_check
      _
    $region11: #{tpu_custom_call.1} parent=1 // pred_check_branch
      %30 = sbr.rel (0) target = $region13
    $region12: #{tpu_custom_call.1} parent=1 // pred_region
      %s32 = ssub.s32 256, 256
      %33 = vsyncadd [#allocation4], %s32
      %s35 = sshll.u32 [#allocation5], 4
      %s36 = int_to_ptr.vmem [resolvable:$true] %s35
      %38 = dma.vmem_to_hbm [thread:$0]  %s36, 256, %s1, [#allocation4]
    $region13: #{tpu_custom_call.1} parent=1 // pred_fallthru
      _
    // Predicated region
    $region14: #{tpu_custom_call.1} parent=1 // pred_check
      _
    $region15: #{tpu_custom_call.1} parent=1 // pred_check_branch
      %40 = sbr.rel (0) target = $region17
    $region16: #{tpu_custom_call.1} parent=1 // pred_region
      %41 = dma.done [#allocation4], 256
    $region17: #{tpu_custom_call.1} parent=1 // pred_fallthru
      _
    %42 = vsyncpa [#allocation3], 1
    %43 = vsyncpa [#allocation4], 1

</llo_original>
